<compile_context>
chip_gen: v7x
topology: tpu7x:2x2x1
jax: 0.10.0
libtpu: 0.0.40
codegen_flags: <defaults>
</compile_context>

<pallas_src>
import jax
import jax.numpy as jnp
from jax.experimental import pallas as pl
from jax.experimental.pallas import tpu as pltpu


def _sublane_multiple(dtype) -> int:
    """Sublane packing multiple for the second-minor block dim."""
    itemsize = jnp.dtype(dtype).itemsize
    if itemsize >= 4:
        return 8
    if itemsize == 2:
        return 16
    return 32  # int8 / fp8


def _round_up(x: int, m: int) -> int:
    return ((x + m - 1) // m) * m


def _vd_kernel(x_ref, m_ref, o_ref):
    # One multiply per element; math in f32 so the 1/(1-p) scale is exact,
    # cast once at the store.  m_ref broadcasts over the temporal dimension
    # (sublanes in the time-major layout, middle axis in batch_first layout).
    xf = x_ref[...].astype(jnp.float32)
    o_ref[...] = (xf * m_ref[...]).astype(o_ref.dtype)


def _pick_tiles_time_major(T, BF, dsize, sub, target_bytes):
    """Pick (t_tile, n_tile) for a (T, B*F) array, targeting ~target_bytes blocks."""
    # Lane tile: full row if it fits; otherwise a 128-multiple fitting the budget.
    if BF * dsize * sub <= target_bytes:
        n_tile = BF
    else:
        n_tile = max(128, (target_bytes // (sub * dsize)) // 128 * 128)
        if n_tile >= BF:
            n_tile = BF
    tile_row_bytes = n_tile * dsize

    # Temporal tile: largest multiple of `sub` whose block fits the budget,
    # clamped to the full extent (which is always a legal block dim).
    t_tile = max(sub, (target_bytes // tile_row_bytes) // sub * sub)
    if t_tile >= T:
        t_tile = T

    # Best effort: >= 2 grid steps so v7x can shard across both TensorCores.
    if pl.cdiv(T, t_tile) * pl.cdiv(BF, n_tile) < 2:
        if T >= 2 * sub:
            t_tile = min(t_tile, _round_up(pl.cdiv(T, 2), sub))
        elif BF >= 256 and n_tile == BF:
            n_tile = _round_up(pl.cdiv(BF, 2), 128)
    return t_tile, n_tile


def _pick_tiles_batch_first(B, T, F, dsize, sub, target_bytes):
    """Pick (b_tile, t_tile) for a (B, T, F) array; F stays whole (lane dim)."""
    tf_bytes = T * F * dsize
    if tf_bytes <= target_bytes:
        t_tile = T
        b_tile = max(1, min(B, target_bytes // tf_bytes))
    else:
        b_tile = 1
        t_tile = max(sub, (target_bytes // (F * dsize)) // sub * sub)
        if t_tile >= T:
            t_tile = T

    # Best effort: >= 2 grid steps for v7x megacore sharding.
    if pl.cdiv(B, b_tile) * pl.cdiv(T, t_tile) < 2:
        if B >= 2:
            b_tile = min(b_tile, pl.cdiv(B, 2))
        elif T >= 2 * sub:
            t_tile = min(t_tile, _round_up(pl.cdiv(T, 2), sub))
    return b_tile, t_tile


def variational_dropout(x, key, dropout: float, *, training: bool = True,
                        batch_first: bool = False,
                        target_block_bytes: int = 8 << 20):
    """Applies the same dropout mask across the temporal dimension.

    x: (T, B, F) if batch_first=False (PyTorch default), else (B, T, F).
    Returns an array of the same shape/dtype.
    """
    if not training or dropout <= 0.0:
        return x

    dtype = x.dtype
    dsize = jnp.dtype(dtype).itemsize
    sub = _sublane_multiple(dtype)
    keep_prob = 1.0 - float(dropout)
    scale = jnp.float32(1.0 / keep_prob)

    if batch_first:
        B, T, F = x.shape
        keep = jax.random.bernoulli(key, p=keep_prob, shape=(B, F))
        m = jnp.where(keep, scale, jnp.float32(0.0)).reshape(B, 1, F)

        b_tile, t_tile = _pick_tiles_batch_first(B, T, F, dsize, sub,
                                                 target_block_bytes)
        grid = (pl.cdiv(B, b_tile), pl.cdiv(T, t_tile))

        block_bytes = b_tile * t_tile * F * dsize
        mask_block_bytes = b_tile * F * 4
        in_specs = [
            pl.BlockSpec((b_tile, t_tile, F), lambda b, t: (b, t, 0)),
            pl.BlockSpec((b_tile, 1, F), lambda b, t: (b, 0, 0)),
        ]
        out_spec = pl.BlockSpec((b_tile, t_tile, F), lambda b, t: (b, t, 0))
        total_elems = B * T * F
        mask_total_bytes = B * F * 4
        x_in = x
    else:
        T, B, F = x.shape
        BF = B * F
        keep = jax.random.bernoulli(key, p=keep_prob, shape=(B, F))
        m = jnp.where(keep, scale, jnp.float32(0.0)).reshape(1, BF)
        x_in = x.reshape(T, BF)  # lane-dense: last dim is B*F

        t_tile, n_tile = _pick_tiles_time_major(T, BF, dsize, sub,
                                                target_block_bytes)
        grid = (pl.cdiv(T, t_tile), pl.cdiv(BF, n_tile))

        block_bytes = t_tile * n_tile * dsize
        mask_block_bytes = n_tile * 4
        in_specs = [
            pl.BlockSpec((t_tile, n_tile), lambda i, j: (i, j)),
            pl.BlockSpec((1, n_tile), lambda i, j: (0, j)),  # same mask every T step
        ]
        out_spec = pl.BlockSpec((t_tile, n_tile), lambda i, j: (i, j))
        total_elems = T * BF
        mask_total_bytes = BF * 4

    # VMEM: in + out double-buffered plus the mask block, with headroom.  The
    # tile picker keeps this well under v7x's 64 MiB physical VMEM; the explicit
    # limit also lifts v5e's 16 MiB scoped default when blocks are large.
    vmem_need = 4 * block_bytes + 2 * mask_block_bytes
    vmem_limit = min(max(vmem_need + (4 << 20), 16 << 20), 48 << 20)
    if vmem_need + (2 << 20) > vmem_limit:
        vmem_limit = vmem_need + (2 << 20)

    cost = pl.CostEstimate(
        flops=total_elems,
        transcendentals=0,
        bytes_accessed=2 * total_elems * dsize + mask_total_bytes,
    )

    out = pl.pallas_call(
        _vd_kernel,
        out_shape=jax.ShapeDtypeStruct(x_in.shape, dtype),
        grid_spec=pl.GridSpec(grid=grid, in_specs=in_specs, out_specs=out_spec),
        compiler_params=pltpu.CompilerParams(
            dimension_semantics=("parallel", "parallel"),
            vmem_limit_bytes=int(vmem_limit),
        ),
        cost_estimate=cost,
    )(x_in, m)

    if not batch_first:
        out = out.reshape(T, B, F)
    return out


if __name__ == "__main__":
    T, B, F = 24, 4, 128          # seq=24 (non-power-of-two -> cdiv boundary), batch=4, hidden=128
    p = 0.5

    key = jax.random.PRNGKey(0)
    kx, km = jax.random.split(key)
    x = jax.random.normal(kx, (T, B, F), dtype=jnp.float32)

    # Reference mask (same key / same bernoulli call as inside the wrapper).
    keep = jax.random.bernoulli(km, p=1.0 - p, shape=(B, F))
    expected = jnp.where(keep[None, :, :], x / (1.0 - p), jnp.float32(0.0))

    # Time-major (PyTorch default) path.
    out = jax.block_until_ready(variational_dropout(x, km, p, training=True))
    assert out.shape == x.shape and out.dtype == x.dtype
    assert bool(jnp.allclose(out, expected, rtol=1e-5, atol=1e-5))
    kept0 = out[0] != 0.0
    for t in range(T):
        assert bool(jnp.all((out[t] != 0.0) == kept0))   # same mask every time step

    # batch_first path (native 3-D tiling, no transposes): (B, T, F).
    xb = jnp.swapaxes(x, 0, 1)
    out_bf = jax.block_until_ready(
        variational_dropout(xb, km, p, training=True, batch_first=True))
    assert out_bf.shape == xb.shape
    assert bool(jnp.allclose(jnp.swapaxes(out_bf, 0, 1), out, rtol=1e-5, atol=1e-5))

    # bf16 path (exercises the 16-sublane packing rule in the tile picker).
    xh = x.astype(jnp.bfloat16)
    out_h = jax.block_until_ready(variational_dropout(xh, km, p, training=True))
    exp_h = jnp.where(keep[None, :, :],
                      (xh.astype(jnp.float32) / (1.0 - p)).astype(jnp.bfloat16),
                      jnp.bfloat16(0.0))
    assert out_h.dtype == jnp.bfloat16
    assert bool(jnp.allclose(out_h.astype(jnp.float32), exp_h.astype(jnp.float32),
                             rtol=1e-2, atol=1e-2))

    # Eval mode / p == 0 is the identity (pure passthrough, like PyTorch).
    out_eval = variational_dropout(x, km, p, training=False)
    assert bool(jnp.array_equal(out_eval, x))
    out_p0 = variational_dropout(x, km, 0.0, training=True)
    assert bool(jnp.array_equal(out_p0, x))

    print("KERNEL_OK")
</pallas_src>

<mosaic_0001>
module attributes {stable_mosaic.version = 11 : i64} {
  func.func @_vd_kernel(%arg0: i32, %arg1: i32, %arg2: memref<16x512xf32, #tpu.memory_space<vmem>>, %arg3: memref<1x512xf32, #tpu.memory_space<vmem>>, %arg4: memref<16x512xf32, #tpu.memory_space<vmem>>) attributes {dimension_semantics = [#tpu.dimension_semantics<parallel>, #tpu.dimension_semantics<parallel>], iteration_bounds = array<i64: 2, 1>, scalar_prefetch = 0 : i64, scratch_operands = 0 : i64, tpu.core_type = #tpu.core_type<tc>, window_params = [{transform_indices = @transform_0, window_bounds = array<i64: 16, 512>}, {transform_indices = @transform_1, window_bounds = array<i64: 1, 512>}, {transform_indices = @transform_2, window_bounds = array<i64: 16, 512>}]} {
    %c0 = arith.constant 0 : index
    %c0_0 = arith.constant 0 : index
    %0 = vector.load %arg2[%c0, %c0_0] : memref<16x512xf32, #tpu.memory_space<vmem>>, vector<16x512xf32>
    %c0_1 = arith.constant 0 : index
    %c0_2 = arith.constant 0 : index
    %1 = vector.load %arg3[%c0_1, %c0_2] : memref<1x512xf32, #tpu.memory_space<vmem>>, vector<1x512xf32>
    %2 = vector.broadcast %1 : vector<1x512xf32> to vector<16x512xf32>
    %3 = arith.mulf %0, %2 : vector<16x512xf32>
    %c0_3 = arith.constant 0 : index
    %c0_4 = arith.constant 0 : index
    %4 = vector.load %arg4[%c0_3, %c0_4] : memref<16x512xf32, #tpu.memory_space<vmem>>, vector<16x512xf32>
    tpu.vector_store %arg4[%c0_3, %c0_4], %3 {strides = array<i32>} : memref<16x512xf32, #tpu.memory_space<vmem>>, vector<16x512xf32>,
    return
  }
  func.func @transform_0(%arg0: i32, %arg1: i32) -> (i32, i32) {
    %c0_i32 = arith.constant 0 : i32
    return %arg0, %arg1 : i32, i32
  }
  func.func @transform_1(%arg0: i32, %arg1: i32) -> (i32, i32) {
    %c0_i32 = arith.constant 0 : i32
    %c0_i32_0 = arith.constant 0 : i32
    return %c0_i32, %arg1 : i32, i32
  }
  func.func @transform_2(%arg0: i32, %arg1: i32) -> (i32, i32) {
    %c0_i32 = arith.constant 0 : i32
    return %arg0, %arg1 : i32, i32
  }
}

</mosaic_0001>

<llo_original>
// kernel: tpu_custom_call.1
$region0: #{tpu_custom_call.1}
  #allocation0 [shape = 'u32[]', space=smem, size = 0x4, offset = 0x4, fixed_abs, tag = 'smem constant byte address 0x4 - core index']
  #allocation1 [shape = 'u32[144,128]{1,0:T(1,128)}', space=vmem, size = 0x12000, scoped, tag = 'internal scratch']
  %s0 = inlined_call_operand.hbm [shape: f32[24,512], index: 0, kind: input, shape index: {}]
  %s1 = inlined_call_operand.hbm [shape: f32[1,512], index: 1, kind: input, shape index: {}]
  %s2 = inlined_call_operand.hbm [shape: f32[24,512], index: 2, kind: output, shape index: {}]
  %s3 = sld [smem:[#allocation0]]
  $region49: #{tpu_custom_call.1} parent=0
    _
  %s5 = ssub.s32 1, %s3
  %s6 = scalar_select 0, %s5, %s3
  $region1: #{tpu_custom_call.1} parent=0
    #allocation2 [shape = 'u8[65536]{0}', space=vmem, size = 0x10000, scoped, tag = 'input window, operand 0']
    #allocation3 [shape = 's32[2]{0}', space=sflag, size = 0x8, scoped, tag = 'scoped memory for tpu_custom_call.1']
    #allocation4 [shape = 's32[2]{0}', space=sflag, size = 0x8, scoped, tag = 'scoped memory for tpu_custom_call.1']
    #allocation5 [shape = 'u8[2048]{0}', space=vmem, size = 0x800, scoped, tag = 'input window, operand 1, single buffered']
    #allocation6 [shape = 's32[1]{0}', space=sflag, size = 0x4, scoped, tag = 'scoped memory for tpu_custom_call.1']
    #allocation7 [shape = 'u8[65536]{0}', space=vmem, size = 0x10000, scoped, tag = 'output window, operand 0']
    %7 = vsyncpa [#allocation3], 0
    %s8 = scalar_lea.sflag [#allocation3], 1
    %9 = vsyncpa %s8, 0
    %10 = vsyncpa [#allocation6], 0
    %11 = vsyncpa [#allocation4], 0
    %s12 = scalar_lea.sflag [#allocation4], 1
    %13 = vsyncpa %s12, 0
    loop: start=0, step=1, limit=4
    $region2: #{tpu_custom_call.1} parent=1 // loop_pre_header
      _
    $region3: #{tpu_custom_call.1} parent=1 // loop_header
      %s15 = sphi 0, %s19
      %p16 = scmp.ge.s32.totalorder %s15, 4
      %s22 = sphi 0, %s34
      %s23 = sphi 0, %s30
      %s24 = sphi 0, %s22
      %s25 = sphi 0, %s23
      %s26 = sphi 0, %s24
      %s27 = sphi 0, %s25
      %s39 = sphi 0, %s41
      %s42 = sphi 0, %s39
      %s43 = sphi 0, %s42
      %s59 = sphi 0, %s43
      %s65 = sphi 0, %s67
      %s68 = sphi 0, %s65
      %s69 = sphi 0, %s68
      %s85 = sphi 0, %s69
      %s93 = sphi 0, %s95
      %s96 = sphi 0, %s93
      %s97 = sphi 0, %s96
      %s113 = sphi 0, %s97
    $region4: #{tpu_custom_call.1} parent=1 // loop_header_branch
      %18 = sbr.rel (%p16) target = $region8
    $region5: #{tpu_custom_call.1} parent=1 // loop_body
      %s20 = ssub.s32 %s15, 1
      %s21 = ssub.s32 %s15, 2
      %s28 = sadd.s32 1, %s23
      %p29 = scmp.ge.s32.totalorder %s28, 1
      %s30 = scalar_select %p29, 0, %s28
      %s31 = sadd.s32 1, %s22
      %s32 = scalar_select %p29, %s31, %s22
      %p33 = scmp.ge.s32.totalorder %s32, 2
      %s34 = scalar_select %p33, 0, %s32
      %s35 = ssub.s32 %s22, %s34
      %s36 = ssub.s32 %s23, %s30
      %s37 = sor.u32 %s35, %s36
      %p38 = scmp.eq.s32.totalorder %s37, 0
      %s40 = sadd.s32 %s39, 1
      %s41 = scalar_select %p38, %s39, %s40
      %p44 = pneg %p38
      %p45 = scmp.eq.s32.totalorder %s15, 1
      %p46 = por %p44, %p45
      %p47 = scmp.ne.s32.totalorder %s39, %s42
      %p48 = scmp.eq.s32.totalorder %s15, 0
      %p49 = por %p47, %p48
      %p50 = scmp.ne.s32.totalorder %s39, %s42
      %p51 = scmp.eq.s32.totalorder %s20, 1
      %p52 = por %p50, %p51
      %p53 = scmp.ne.s32.totalorder %s42, %s43
      %p54 = scmp.eq.s32.totalorder %s20, 0
      %p55 = por %p53, %p54
      %p56 = scmp.ne.s32.totalorder %s42, %s43
      %p57 = scmp.eq.s32.totalorder %s21, 1
      %p58 = por %p56, %p57
      %p60 = scmp.ne.s32.totalorder %s43, %s59
      %p61 = scmp.eq.s32.totalorder %s21, 0
      %p62 = por %p60, %p61
      %s63 = ssub.s32 %s23, %s30
      %p64 = scmp.eq.s32.totalorder %s63, 0
      %s66 = sadd.s32 %s65, 1
      %s67 = scalar_select %p64, %s65, %s66
      %p70 = pneg %p64
      %p71 = scmp.eq.s32.totalorder %s15, 1
      %p72 = por %p70, %p71
      %p73 = scmp.ne.s32.totalorder %s65, %s68
      %p74 = scmp.eq.s32.totalorder %s15, 0
      %p75 = por %p73, %p74
      %p76 = scmp.ne.s32.totalorder %s65, %s68
      %p77 = scmp.eq.s32.totalorder %s20, 1
      %p78 = por %p76, %p77
      %p79 = scmp.ne.s32.totalorder %s68, %s69
      %p80 = scmp.eq.s32.totalorder %s20, 0
      %p81 = por %p79, %p80
      %p82 = scmp.ne.s32.totalorder %s68, %s69
      %p83 = scmp.eq.s32.totalorder %s21, 1
      %p84 = por %p82, %p83
      %p86 = scmp.ne.s32.totalorder %s69, %s85
      %p87 = scmp.eq.s32.totalorder %s21, 0
      %p88 = por %p86, %p87
      %s89 = ssub.s32 %s22, %s34
      %s90 = ssub.s32 %s23, %s30
      %s91 = sor.u32 %s89, %s90
      %p92 = scmp.eq.s32.totalorder %s91, 0
      %s94 = sadd.s32 %s93, 1
      %s95 = scalar_select %p92, %s93, %s94
      %p98 = pneg %p92
      %p99 = scmp.eq.s32.totalorder %s15, 1
      %p100 = por %p98, %p99
      %p101 = scmp.ne.s32.totalorder %s93, %s96
      %p102 = scmp.eq.s32.totalorder %s15, 0
      %p103 = por %p101, %p102
      %p104 = scmp.ne.s32.totalorder %s93, %s96
      %p105 = scmp.eq.s32.totalorder %s20, 1
      %p106 = por %p104, %p105
      %p107 = scmp.ne.s32.totalorder %s96, %s97
      %p108 = scmp.eq.s32.totalorder %s20, 0
      %p109 = por %p107, %p108
      %p110 = scmp.ne.s32.totalorder %s96, %s97
      %p111 = scmp.eq.s32.totalorder %s21, 1
      %p112 = por %p110, %p111
      %p114 = scmp.ne.s32.totalorder %s97, %s113
      %p115 = scmp.eq.s32.totalorder %s21, 0
      %p116 = por %p114, %p115
      %p117 = scmp.le.s32.totalorder 1, %s15
      %p118 = scmp.lt.s32.totalorder %s15, 3
      %p119 = pnand %p117, %p118
      %p120 = pneg %p119
      // Predicated region
      $region9: #{tpu_custom_call.1} parent=5 // pred_check
        _
      $region10: #{tpu_custom_call.1} parent=5 // pred_check_branch
        %122 = sbr.rel (%p119) target = $region12
      $region11: #{tpu_custom_call.1} parent=5 // pred_region
        %s123 = ssub.s32 %s15, 1
        // Predicated region
        $region13: #{tpu_custom_call.1} parent=11 // pred_check
          %p124 = pneg %p81
        $region14: #{tpu_custom_call.1} parent=11 // pred_check_branch
          %126 = sbr.rel (%p124) target = $region16
        $region15: #{tpu_custom_call.1} parent=11 // pred_region
          %s127 = smul.u32 4, %s25
          %s129 = ssub.s32 64, 64
          %130 = vsyncadd [#allocation6], %s129
          %s131 = smul.addr %s127, 16
          %s132 = scalar_lea.hbm %s1, %s131
          %s134 = sshll.u32 [#allocation5], 4
          %s135 = int_to_ptr.vmem [resolvable:$true] %s134
          %137 = dma.hbm_to_vmem [thread:$0]  %s132, 64, %s135, [#allocation6]
        $region16: #{tpu_custom_call.1} parent=11 // pred_fallthru
          _
      $region12: #{tpu_custom_call.1} parent=5 // pred_fallthru
        _
      %p138 = scmp.lt.s32.totalorder %s15, 2
      // Predicated region
      $region17: #{tpu_custom_call.1} parent=5 // pred_check
        %p139 = pneg %p138
      $region18: #{tpu_custom_call.1} parent=5 // pred_check_branch
        %141 = sbr.rel (%p139) target = $region20
      $region19: #{tpu_custom_call.1} parent=5 // pred_region
        // Predicated region
        $region21: #{tpu_custom_call.1} parent=19 // pred_check
          %p142 = pneg %p49
        $region22: #{tpu_custom_call.1} parent=19 // pred_check_branch
          %144 = sbr.rel (%p142) target = $region24
        $region23: #{tpu_custom_call.1} parent=19 // pred_region
          %s145 = sand.u32 %s39, 1
          %s146 = scalar_lea.sflag [#allocation3], %s145
          %s147 = sand.u32 %s39, 1
          %s148 = smul.addr %s147, 64
          %s149 = scalar_lea.vmem [#allocation2], %s148
          %s150 = smul.u32 2, %s22
          %s151 = smul.u32 4, %s23
          %s152 = ssub.s32 3, %s150
          %p153 = scmp.lt.s32.totalorder %s152, 2
          %s154 = scalar_select %p153, %s152, 2
          %s155 = smul.u32 128, %s154
          %s156 = smul.u32 %s155, 4
          %s158 = ssub.s32 1024, %s156
          %159 = vsyncadd %s146, %s158
          %p160 = scmp.ne.s32.totalorder 0, %s156
          %s161 = smul.addr %s150, 4
          %s162 = sadd.s32 %s151, %s161
          %s163 = smul.addr %s162, 128
          %s164 = scalar_lea.hbm %s0, %s163
          %s165 = smul.u32 32, %s154
          %s166 = sshll.u32 %s149, 4
          %s167 = int_to_ptr.vmem [resolvable:$true] %s166
          %s168 = sshll.u32 %s165, 4
          %172 = dma.hbm_to_vmem [thread:$0]  (%p160), %s164, %s168, %s167, %s146, 512, 512, 32
        $region24: #{tpu_custom_call.1} parent=19 // pred_fallthru
          _
      $region20: #{tpu_custom_call.1} parent=5 // pred_fallthru
        _
      %p173 = scmp.le.s32.totalorder 1, %s15
      %p174 = scmp.lt.s32.totalorder %s15, 3
      %p175 = pnand %p173, %p174
      %p176 = pneg %p175
      // Predicated region
      $region25: #{tpu_custom_call.1} parent=5 // pred_check
        _
      $region26: #{tpu_custom_call.1} parent=5 // pred_check_branch
        %178 = sbr.rel (%p175) target = $region28
      $region27: #{tpu_custom_call.1} parent=5 // pred_region
        %s179 = ssub.s32 %s15, 1
        %s180 = sand.u32 %s42, 1
        %s181 = scalar_lea.sflag [#allocation3], %s180
        %s182 = sand.u32 %s42, 1
        %s183 = smul.addr %s182, 64
        %s184 = scalar_lea.vmem [#allocation2], %s183
        // Predicated region
        $region29: #{tpu_custom_call.1} parent=27 // pred_check
          %p185 = pneg %p55
        $region30: #{tpu_custom_call.1} parent=27 // pred_check_branch
          %187 = sbr.rel (%p185) target = $region32
        $region31: #{tpu_custom_call.1} parent=27 // pred_region
          %188 = dma.done %s181, 1024
        $region32: #{tpu_custom_call.1} parent=27 // pred_fallthru
          _
        // Predicated region
        $region33: #{tpu_custom_call.1} parent=27 // pred_check
          %p189 = pneg %p81
        $region34: #{tpu_custom_call.1} parent=27 // pred_check_branch
          %191 = sbr.rel (%p189) target = $region36
        $region35: #{tpu_custom_call.1} parent=27 // pred_region
          %192 = dma.done [#allocation6], 64
        $region36: #{tpu_custom_call.1} parent=27 // pred_fallthru
          _
        %s193 = sand.u32 %s42, 1
        %s194 = scalar_lea.sflag [#allocation3], %s193
        %s195 = sand.u32 %s42, 1
        %s196 = smul.addr %s195, 64
        %s197 = scalar_lea.vmem [#allocation2], %s196
        %p198 = pneg %p55
        %p199 = pneg %p52
        %p200 = pneg %p81
        %p201 = pneg %p78
        %p202 = pneg %p109
        %p203 = pneg %p106
        %s204 = sand.u32 %s96, 1
        %s205 = scalar_lea.sflag [#allocation4], %s204
        %s206 = sand.u32 %s96, 1
        %s207 = smul.addr %s206, 64
        %s208 = scalar_lea.vmem [#allocation7], %s207
        %s209 = smul.u32 2, %s24
        %s210 = smul.u32 4, %s25
        %s211 = ssub.s32 3, %s209
        %p212 = scmp.lt.s32.totalorder %s211, 2
        %s213 = scalar_select %p212, %s211, 2
        %s214 = smul.u32 128, %s213
        %s215 = smul.u32 %s214, 4
        %s216 = smul.u32 4, %s25
        %s217 = smul.u32 2, %s24
        %s218 = smul.u32 4, %s25
        %s219 = ssub.s32 3, %s217
        %p220 = scmp.lt.s32.totalorder %s219, 2
        %s221 = scalar_select %p220, %s219, 2
        %s222 = smul.u32 128, %s221
        %s223 = smul.u32 %s222, 4
        %v224 = vld [vmem:[%s184] sm:$0xff]
        %v225 = vld [vmem:[%s184 + $0x8] sm:$0xff]
        %v226 = vld [vmem:[%s184 + $0x10] sm:$0xff]
        %v227 = vld [vmem:[%s184 + $0x18] sm:$0xff]
        %v228 = vld [vmem:[%s184 + $0x20] sm:$0xff]
        %v229 = vld [vmem:[%s184 + $0x28] sm:$0xff]
        %v230 = vld [vmem:[%s184 + $0x30] sm:$0xff]
        %v231 = vld [vmem:[%s184 + $0x38] sm:$0xff]
        %v232 = vld [vmem:[#allocation5] sm:$0xf]
        %v234 = vlaneseq
        %v235 = vshrl.u32 %v234, 7
        %v236 = vsub.s32 0, %v235
        %v237 = vrot.slane %v232, %v236
        %v238 = vlaneseq
        %v239 = vshrl.u32 %v238, 7
        %v240 = vsub.s32 1, %v239
        %v241 = vrot.slane %v232, %v240
        %v242 = vlaneseq
        %v243 = vshrl.u32 %v242, 7
        %v244 = vsub.s32 2, %v243
        %v245 = vrot.slane %v232, %v244
        %v246 = vlaneseq
        %v247 = vshrl.u32 %v246, 7
        %v248 = vsub.s32 3, %v247
        %v249 = vrot.slane %v232, %v248
        %v254 = vmul.f32 %v224, %v237
        %v255 = vmul.f32 %v225, %v241
        %v256 = vmul.f32 %v226, %v245
        %v257 = vmul.f32 %v227, %v249
        %v258 = vmul.f32 %v228, %v237
        %v259 = vmul.f32 %v229, %v241
        %v260 = vmul.f32 %v230, %v245
        %v261 = vmul.f32 %v231, %v249
        %262 = vst [vmem:[%s208] sm:$0xff] %v254
        %263 = vst [vmem:[%s208 + $0x8] sm:$0xff] %v255
        %264 = vst [vmem:[%s208 + $0x10] sm:$0xff] %v256
        %265 = vst [vmem:[%s208 + $0x18] sm:$0xff] %v257
        %266 = vst [vmem:[%s208 + $0x20] sm:$0xff] %v258
        %267 = vst [vmem:[%s208 + $0x28] sm:$0xff] %v259
        %268 = vst [vmem:[%s208 + $0x30] sm:$0xff] %v260
        %269 = vst [vmem:[%s208 + $0x38] sm:$0xff] %v261
        %s270 = sand.u32 %s96, 1
        %s271 = scalar_lea.sflag [#allocation4], %s270
        %s272 = sand.u32 %s96, 1
        %s273 = smul.addr %s272, 64
        %s274 = scalar_lea.vmem [#allocation7], %s273
        // Predicated region
        $region37: #{tpu_custom_call.1} parent=27 // pred_check
          %p275 = pneg %p106
        $region38: #{tpu_custom_call.1} parent=27 // pred_check_branch
          %277 = sbr.rel (%p275) target = $region40
        $region39: #{tpu_custom_call.1} parent=27 // pred_region
          %s278 = smul.u32 2, %s24
          %s279 = smul.u32 4, %s25
          %s280 = ssub.s32 3, %s278
          %p281 = scmp.lt.s32.totalorder %s280, 2
          %s282 = scalar_select %p281, %s280, 2
          %s283 = smul.u32 128, %s282
          %s284 = smul.u32 %s283, 4
          %s286 = ssub.s32 1024, %s284
          %287 = vsyncadd %s271, %s286
          %p288 = scmp.ne.s32.totalorder 0, %s284
          %s289 = smul.addr %s278, 4
          %s290 = sadd.s32 %s279, %s289
          %s291 = smul.addr %s290, 128
          %s292 = scalar_lea.hbm %s2, %s291
          %s293 = smul.u32 32, %s282
          %s294 = sshll.u32 %s274, 4
          %s295 = int_to_ptr.vmem [resolvable:$true] %s294
          %s296 = sshll.u32 %s293, 4
          %300 = dma.vmem_to_hbm [thread:$0]  (%p288), %s295, %s296, %s292, %s271, 512, 512, 32
        $region40: #{tpu_custom_call.1} parent=27 // pred_fallthru
          _
      $region28: #{tpu_custom_call.1} parent=5 // pred_fallthru
        _
      %p301 = scmp.le.s32.totalorder 2, %s15
      // Predicated region
      $region41: #{tpu_custom_call.1} parent=5 // pred_check
        %p302 = pneg %p301
      $region42: #{tpu_custom_call.1} parent=5 // pred_check_branch
        %304 = sbr.rel (%p302) target = $region44
      $region43: #{tpu_custom_call.1} parent=5 // pred_region
        %s305 = ssub.s32 %s15, 2
        // Predicated region
        $region45: #{tpu_custom_call.1} parent=43 // pred_check
          %p306 = pneg %p112
        $region46: #{tpu_custom_call.1} parent=43 // pred_check_branch
          %308 = sbr.rel (%p306) target = $region48
        $region47: #{tpu_custom_call.1} parent=43 // pred_region
          %s309 = sand.u32 %s97, 1
          %s310 = scalar_lea.sflag [#allocation4], %s309
          %s311 = sand.u32 %s97, 1
          %s312 = smul.addr %s311, 64
          %s313 = scalar_lea.vmem [#allocation7], %s312
          %314 = dma.done %s310, 1024
        $region48: #{tpu_custom_call.1} parent=43 // pred_fallthru
          _
      $region44: #{tpu_custom_call.1} parent=5 // pred_fallthru
        _
    $region6: #{tpu_custom_call.1} parent=1 // loop_footer
      %s19 = sadd.s32 1, %s15
    $region7: #{tpu_custom_call.1} parent=1 // loop_footer_branch
      %14 = sbr.rel target = $region3
    $region8: #{tpu_custom_call.1} parent=1 // loop_exit
      _
    %315 = vsyncpa [#allocation3], 1
    %s316 = scalar_lea.sflag [#allocation3], 1
    %317 = vsyncpa %s316, 1
    %318 = vsyncpa [#allocation6], 1
    %319 = vsyncpa [#allocation4], 1
    %s320 = scalar_lea.sflag [#allocation4], 1
    %321 = vsyncpa %s320, 1

</llo_original>
